<compile_context>
chip_gen: v5e
topology: v5e:2x2
jax: 0.10.0
libtpu: 0.0.40
codegen_flags: <defaults>
</compile_context>

<pallas_src>
import jax
import jax.numpy as jnp
from jax import lax
from jax.experimental import pallas as pl
from jax.experimental.pallas import tpu as pltpu


_MIB = 1024 * 1024
# Contract the last dim of both operands: (tm, tk) x (tn, tk) -> (tm, tn), i.e. X @ W^T
# directly on the (out, in) weight layout -- no eager transposes.
_CONTRACT_LAST = (((1,), (1,)), ((), ()))
_LORA_R_PAD = 128   # lane-dense rank padding for the epilogue matmul


def _round_up(v, m):
    return ((v + m - 1) // m) * m


def _tpu_vmem_bytes():
    """Per-core VMEM capacity (falls back to a conservative v7x-sized 64 MiB)."""
    try:
        info = pltpu.get_tpu_info()
        for attr in ("vmem_capacity_bytes", "vmem_bytes", "vmem_size_bytes"):
            v = getattr(info, attr, None)
            if v:
                return int(v)
    except Exception:
        pass
    return 64 * _MIB


def _pick_tile(dim, align, max_tile):
    """Largest tile <= max_tile that is a multiple of `align`.  Prefer a tile that
    divides the aligned dim exactly (avoids extra padding) unless that would shrink
    the tile by more than 2x."""
    aligned = _round_up(max(int(dim), 1), align)
    cap = max(align, (min(max_tile, aligned) // align) * align)
    cand = cap
    while cand >= align:
        if aligned % cand == 0:
            break
        cand -= align
    if cand >= align and 2 * cand >= cap:
        return cand
    return cap


def _pad2d(a, rows, cols, dtype=None):
    """Cast first (narrower dtype -> cheaper pad), then pad only if needed."""
    if dtype is not None and a.dtype != dtype:
        a = a.astype(dtype)
    pr, pc = rows - a.shape[0], cols - a.shape[1]
    if pr or pc:
        a = jnp.pad(a, ((0, pr), (0, pc)))
    return a


# ---------------------------------------------------------------------------
# Kernels
# ---------------------------------------------------------------------------

def _linear_kernel(x_ref, w_ref, bias_ref, o_ref, acc_ref):
    """y = x @ W^T + bias, tiled over (M, N, K); fused last-K epilogue."""
    k = pl.program_id(2)
    nk = pl.num_programs(2)

    @pl.when(k == 0)
    def _():
        acc_ref[...] = jnp.zeros_like(acc_ref)

    partial = lax.dot_general(
        x_ref[...], w_ref[...], dimension_numbers=_CONTRACT_LAST,
        preferred_element_type=jnp.float32)

    @pl.when(k < nk - 1)
    def _():
        acc_ref[...] += partial

    @pl.when(k == nk - 1)
    def _():
        # Last partial product goes straight into the output write (no extra
        # accumulator store+reload round trip).
        o_ref[...] = (acc_ref[...] + partial + bias_ref[...]).astype(o_ref.dtype)


def _lora_linear_kernel(x_ref, w_ref, xa_ref, b_ref, bias_ref, o_ref, acc_ref):
    """y = x @ W^T + bias + XA @ B^T, where XA = scale * (x @ A^T) is precomputed
    in the wrapper (j-invariant, lane-dense r_pad=128)."""
    k = pl.program_id(2)
    nk = pl.num_programs(2)

    @pl.when(k == 0)
    def _():
        acc_ref[...] = jnp.zeros_like(acc_ref)

    partial = lax.dot_general(
        x_ref[...], w_ref[...], dimension_numbers=_CONTRACT_LAST,
        preferred_element_type=jnp.float32)

    @pl.when(k < nk - 1)
    def _():
        acc_ref[...] += partial

    @pl.when(k == nk - 1)
    def _():
        # (tm, r_pad) x (tn, r_pad) -> (tm, tn): unmasked, lane-aligned epilogue.
        lora = lax.dot_general(
            xa_ref[...], b_ref[...], dimension_numbers=_CONTRACT_LAST,
            preferred_element_type=jnp.float32)
        o_ref[...] = (acc_ref[...] + partial + bias_ref[...] + lora).astype(o_ref.dtype)


# ---------------------------------------------------------------------------
# One-time (weight-load-time) preparation -- cache and reuse across calls.
# ---------------------------------------------------------------------------

def prepare_compact_lora_params(weight, bias, lora_A=None, lora_B=None, *,
                                r=4, alpha=1.0, lora_enabled=True, fold_lora=True,
                                compute_dtype=None, max_tn=None, max_tk=None):
    """Fold / pad / cast everything that does not depend on the activation, once.

    weight:  (out_features, in_features)   -- nn.Linear.weight
    bias:    (out_features,) or None
    lora_A:  (r, in_features)
    lora_B:  (out_features, r)
    """
    out_features, in_features = weight.shape
    use_lora = (bool(lora_enabled) and r is not None and r > 0
                and lora_A is not None and lora_B is not None)
    scale = (float(alpha) / float(r)) if use_lora else 0.0

    # MXU operand dtype: bf16 by default for f32 weights (accumulation stays f32
    # inside the kernel).  Pass compute_dtype=jnp.float32 for a strict path.
    if compute_dtype is None:
        cdt = jnp.bfloat16 if weight.dtype == jnp.float32 else weight.dtype
    else:
        cdt = compute_dtype

    vmem_cap = _tpu_vmem_bytes()
    big_vmem = vmem_cap >= 96 * _MIB          # v5e / v6e (128 MiB) vs v7x (64 MiB)
    if max_tn is None:
        max_tn = 1024 if big_vmem else 512
    if max_tk is None:
        max_tk = 512

    tn = _pick_tile(out_features, 128, max_tn)
    tk = _pick_tile(in_features, 128, max_tk)
    n_pad = _round_up(out_features, tn)
    k_pad = _round_up(in_features, tk)

    fold = bool(fold_lora) and use_lora
    if fold:
        # Fold the rank-r update into W once, in f32.  NOTE: if the base weight is
        # narrow (bf16) the tiny LoRA delta can be partially swamped by the cast to
        # cdt -- use fold_lora=False (unfused kernel) when that matters.
        w_eff = (weight.astype(jnp.float32)
                 + scale * (lora_B.astype(jnp.float32) @ lora_A.astype(jnp.float32)))
        w_p = _pad2d(w_eff, n_pad, k_pad, dtype=cdt)
        a_f32, b_p = None, None
    else:
        w_p = _pad2d(weight, n_pad, k_pad, dtype=cdt)
        if use_lora:
            a_f32 = lora_A.astype(jnp.float32)                     # for the tiny x@A^T GEMM
            b_p = _pad2d(lora_B, n_pad, _LORA_R_PAD, dtype=cdt)    # lane-dense rank
        else:
            a_f32, b_p = None, None

    bias_row = bias if bias is not None else jnp.zeros((out_features,), jnp.float32)
    bias_p = _pad2d(bias_row.astype(jnp.float32).reshape(1, out_features), 1, n_pad)

    return dict(
        w_p=w_p, b_p=b_p, a_f32=a_f32, bias_p=bias_p,
        in_features=in_features, out_features=out_features,
        n_pad=n_pad, k_pad=k_pad, tn=tn, tk=tk,
        cdt=cdt, scale=scale, use_lora=use_lora, fold=fold,
        vmem_cap=vmem_cap, big_vmem=big_vmem,
    )


# ---------------------------------------------------------------------------
# Hot path: only X-dependent work happens here.
# ---------------------------------------------------------------------------

def compact_lora_linear_prepared(x, params, *, max_tm=None):
    p = params
    out_features = p["out_features"]
    in_features = p["in_features"]
    cdt = p["cdt"]
    tn, tk = p["tn"], p["tk"]
    n_pad, k_pad = p["n_pad"], p["k_pad"]

    orig_dtype = x.dtype
    lead = x.shape[:-1]
    m = 1
    for d in lead:
        m *= d
    x2d = x.reshape(m, in_features)

    if max_tm is None:
        max_tm = 2048 if p["big_vmem"] else 1024
    tm = _pick_tile(m, 8, max_tm)
    m_pad = _round_up(m, tm)

    # Megacore (v7x has 2 TensorCores): guarantee >= 2 parallel (i, j) blocks.
    if (m_pad // tm) * (n_pad // tn) == 1:
        if tm >= 16 and tm % 16 == 0:
            tm //= 2
        elif tn >= 256:
            tn //= 2

    grid = (m_pad // tm, n_pad // tn, k_pad // tk)

    # Only pad / cast X when actually necessary (each materializes an HBM copy).
    x_p = x2d
    if x_p.dtype != cdt:
        x_p = x_p.astype(cdt)
    if (m_pad != m) or (k_pad != in_features):
        x_p = jnp.pad(x_p, ((0, m_pad - m), (0, k_pad - in_features)))

    x_spec = pl.BlockSpec((tm, tk), lambda i, j, k: (i, k))
    w_spec = pl.BlockSpec((tn, tk), lambda i, j, k: (j, k))
    bias_spec = pl.BlockSpec((1, tn), lambda i, j, k: (0, j))
    out_spec = pl.BlockSpec((tm, tn), lambda i, j, k: (i, j))
    # NOTE: on v6e, if DMA is still exposed after the tile bump, pipeline_mode=
    # pl.Buffered(3) on x_spec / w_spec deepens the input pipeline cheaply.

    # VMEM budget derived from the actual double-buffered working set.
    itemsize = jnp.dtype(cdt).itemsize
    out_itemsize = jnp.dtype(orig_dtype).itemsize
    working = 2 * (tm * tk + tn * tk) * itemsize      # double-buffered X and W tiles
    working += 2 * tn * 4                             # bias tile
    working += 2 * tm * tn * out_itemsize             # output tile (double-buffered)
    working += tm * tn * 4                            # f32 accumulator scratch
    if p["use_lora"] and not p["fold"]:
        working += 2 * (tm + tn) * _LORA_R_PAD * itemsize   # XA and B tiles
    vmem_limit = int(min(p["vmem_cap"] - 16 * _MIB,
                         max(working + working // 4, 32 * _MIB)))
    vmem_limit = max(vmem_limit, 16 * _MIB)

    cparams = pltpu.CompilerParams(
        dimension_semantics=("parallel", "parallel", "arbitrary"),
        vmem_limit_bytes=vmem_limit)

    out_bytes = m_pad * n_pad * out_itemsize

    if p["fold"] or not p["use_lora"]:
        # Single tiled GEMM (LoRA folded into W at weight-load time, or disabled).
        flops = 2 * m_pad * n_pad * k_pad
        bytes_accessed = (x_p.size * x_p.dtype.itemsize
                          + p["w_p"].size * p["w_p"].dtype.itemsize
                          + p["bias_p"].size * 4 + out_bytes)
        out2d = pl.pallas_call(
            _linear_kernel,
            out_shape=jax.ShapeDtypeStruct((m_pad, n_pad), orig_dtype),
            grid_spec=pltpu.PrefetchScalarGridSpec(
                num_scalar_prefetch=0,
                grid=grid,
                in_specs=[x_spec, w_spec, bias_spec],
                out_specs=out_spec,
                scratch_shapes=[pltpu.VMEM((tm, tn), jnp.float32)]),
            compiler_params=cparams,
            cost_estimate=pl.CostEstimate(flops=flops, transcendentals=0,
                                          bytes_accessed=bytes_accessed),
        )(x_p, p["w_p"], p["bias_p"])
    else:
        # Unfused (training-style) LoRA: j-invariant XA = scale * (x @ A^T) done once
        # in the wrapper (tiny (M, r) GEMM in f32), padded lane-dense to r_pad=128.
        xa = p["scale"] * (x2d.astype(jnp.float32) @ p["a_f32"].T)
        xa_p = _pad2d(xa, m_pad, _LORA_R_PAD, dtype=cdt)

        xa_spec = pl.BlockSpec((tm, _LORA_R_PAD), lambda i, j, k: (i, 0))
        b_spec = pl.BlockSpec((tn, _LORA_R_PAD), lambda i, j, k: (j, 0))

        flops = 2 * m_pad * n_pad * (k_pad + _LORA_R_PAD)
        bytes_accessed = (x_p.size * x_p.dtype.itemsize
                          + p["w_p"].size * p["w_p"].dtype.itemsize
                          + xa_p.size * xa_p.dtype.itemsize
                          + p["b_p"].size * p["b_p"].dtype.itemsize
                          + p["bias_p"].size * 4 + out_bytes)
        out2d = pl.pallas_call(
            _lora_linear_kernel,
            out_shape=jax.ShapeDtypeStruct((m_pad, n_pad), orig_dtype),
            grid_spec=pltpu.PrefetchScalarGridSpec(
                num_scalar_prefetch=0,
                grid=grid,
                in_specs=[x_spec, w_spec, xa_spec, b_spec, bias_spec],
                out_specs=out_spec,
                scratch_shapes=[pltpu.VMEM((tm, tn), jnp.float32)]),
            compiler_params=cparams,
            cost_estimate=pl.CostEstimate(flops=flops, transcendentals=0,
                                          bytes_accessed=bytes_accessed),
        )(x_p, p["w_p"], xa_p, p["b_p"], p["bias_p"])

    out2d = out2d[:m, :out_features]
    return out2d.reshape(*lead, out_features)


def compact_lora_linear(x, weight, bias, lora_A=None, lora_B=None, *,
                        r=4, alpha=1.0, lora_enabled=True, fold_lora=True,
                        compute_dtype=None, max_tm=None, max_tn=None, max_tk=None):
    """Convenience one-shot wrapper.  For production use, call
    prepare_compact_lora_params() ONCE per weight set and reuse the result with
    compact_lora_linear_prepared() so the fold / pad / cast of W stays off the
    per-forward hot path."""
    params = prepare_compact_lora_params(
        weight, bias, lora_A, lora_B, r=r, alpha=alpha,
        lora_enabled=lora_enabled, fold_lora=fold_lora,
        compute_dtype=compute_dtype, max_tn=max_tn, max_tk=max_tk)
    return compact_lora_linear_prepared(x, params, max_tm=max_tm)


if __name__ == "__main__":
    # Small shapes consistent with the module: batch=2, seq=8, hidden=32, r=4.
    batch, seq = 2, 8
    in_features, out_features, r, alpha = 32, 32, 4, 1.0

    key = jax.random.PRNGKey(0)
    k_x, k_w, k_b, k_a, k_lb = jax.random.split(key, 5)

    x = jax.random.normal(k_x, (batch, seq, in_features), dtype=jnp.float32)
    weight = jax.random.normal(k_w, (out_features, in_features), jnp.float32) * 0.1
    bias = jax.random.normal(k_b, (out_features,), jnp.float32) * 0.1
    lora_A = jax.random.normal(k_a, (r, in_features), jnp.float32) * 0.01
    lora_B = jax.random.normal(k_lb, (out_features, r), jnp.float32) * 0.01

    # Pure-JAX references (match the PyTorch forward exactly).
    ref = x @ weight.T + bias + (alpha / r) * (x @ (lora_B @ lora_A).T)
    ref_nolora = x @ weight.T + bias

    # 1) Folded (inference) path with f32 MXU operands: strict check, and a second
    #    call reusing the cached prepared params (no re-fold / re-pad of W).
    p_fold32 = prepare_compact_lora_params(weight, bias, lora_A, lora_B,
                                           r=r, alpha=alpha, lora_enabled=True,
                                           fold_lora=True, compute_dtype=jnp.float32)
    out_fold = jax.block_until_ready(compact_lora_linear_prepared(x, p_fold32))
    assert out_fold.shape == (batch, seq, out_features)
    assert jnp.allclose(out_fold, ref, atol=1e-4, rtol=1e-4), "fold f32 path mismatch"
    out_fold2 = jax.block_until_ready(compact_lora_linear_prepared(x, p_fold32))
    assert jnp.allclose(out_fold2, ref, atol=1e-4, rtol=1e-4), "cached-params call mismatch"

    # 2) Unfused (training-style) path with f32 MXU operands: strict check.
    p_unf32 = prepare_compact_lora_params(weight, bias, lora_A, lora_B,
                                          r=r, alpha=alpha, lora_enabled=True,
                                          fold_lora=False, compute_dtype=jnp.float32)
    out_lora = jax.block_until_ready(compact_lora_linear_prepared(x, p_unf32))
    assert jnp.allclose(out_lora, ref, atol=1e-4, rtol=1e-4), "unfused f32 path mismatch"

    # 3) Default performance path: bf16 MXU operands, f32 accumulation (fold + unfused).
    out_bf16 = jax.block_until_ready(
        compact_lora_linear(x, weight, bias, lora_A, lora_B,
                            r=r, alpha=alpha, lora_enabled=True, fold_lora=True))
    assert jnp.allclose(out_bf16, ref, atol=3e-2, rtol=3e-2), "bf16 fold path mismatch"

    out_bf16_uf = jax.block_until_ready(
        compact_lora_linear(x, weight, bias, lora_A, lora_B,
                            r=r, alpha=alpha, lora_enabled=True, fold_lora=False))
    assert jnp.allclose(out_bf16_uf, ref, atol=3e-2, rtol=3e-2), "bf16 unfused path mismatch"

    # 4) LoRA disabled: plain linear kernel, no zero matmuls issued.
    out_plain = jax.block_until_ready(
        compact_lora_linear(x, weight, bias, lora_A, lora_B,
                            r=r, alpha=alpha, lora_enabled=False,
                            compute_dtype=jnp.float32))
    assert jnp.allclose(out_plain, ref_nolora, atol=1e-4, rtol=1e-4), "no-lora mismatch"

    print("KERNEL_OK")
</pallas_src>

<mosaic_0001>
module attributes {stable_mosaic.version = 11 : i64} {
  func.func @_linear_kernel(%arg0: i32, %arg1: i32, %arg2: i32, %arg3: memref<8x128xf32, #tpu.memory_space<vmem>>, %arg4: memref<128x128xf32, #tpu.memory_space<vmem>>, %arg5: memref<1x128xf32, #tpu.memory_space<vmem>>, %arg6: memref<8x128xf32, #tpu.memory_space<vmem>>, %arg7: memref<8x128xf32, #tpu.memory_space<vmem>>) attributes {dimension_semantics = [#tpu.dimension_semantics<parallel>, #tpu.dimension_semantics<parallel>, #tpu.dimension_semantics<arbitrary>], iteration_bounds = array<i64: 2, 1, 1>, scalar_prefetch = 0 : i64, scratch_operands = 1 : i64, tpu.core_type = #tpu.core_type<tc>, window_params = [{transform_indices = @transform_0, window_bounds = array<i64: 8, 128>}, {transform_indices = @transform_1, window_bounds = array<i64: 128, 128>}, {transform_indices = @transform_2, window_bounds = array<i64: 1, 128>}, {transform_indices = @transform_3, window_bounds = array<i64: 8, 128>}]} {
    %c0_i32 = arith.constant 0 : i32
    %0 = arith.cmpi eq, %arg2, %c0_i32 : i32
    %1 = arith.extui %0 : i1 to i32
    %c0_i32_0 = arith.constant 0 : i32
    %2 = arith.cmpi ne, %1, %c0_i32_0 : i32
    scf.if %2 {
      %cst_8 = arith.constant 0.000000e+00 : f32
      %12 = vector.broadcast %cst_8 : f32 to vector<8x128xf32>
      %c0_9 = arith.constant 0 : index
      %c0_10 = arith.constant 0 : index
      %13 = vector.load %arg7[%c0_9, %c0_10] : memref<8x128xf32, #tpu.memory_space<vmem>>, vector<8x128xf32>
      tpu.vector_store %arg7[%c0_9, %c0_10], %12 {strides = array<i32>} : memref<8x128xf32, #tpu.memory_space<vmem>>, vector<8x128xf32>,
    } else {
    }
    %c0 = arith.constant 0 : index
    %c0_1 = arith.constant 0 : index
    %3 = vector.load %arg3[%c0, %c0_1] : memref<8x128xf32, #tpu.memory_space<vmem>>, vector<8x128xf32>
    %c0_2 = arith.constant 0 : index
    %c0_3 = arith.constant 0 : index
    %4 = vector.load %arg4[%c0_2, %c0_3] : memref<128x128xf32, #tpu.memory_space<vmem>>, vector<128x128xf32>
    %cst = arith.constant dense<0.000000e+00> : vector<8x128xf32>
    %5 = tpu.matmul %3, %4, %cst {dimension_numbers = #tpu.dot_dimension_numbers<[1], [1], [0], [0], [0, 0, 1, 0], [], []>} : vector<8x128xf32>, vector<128x128xf32>, vector<8x128xf32> -> vector<8x128xf32>
    %c0_i32_4 = arith.constant 0 : i32
    %6 = arith.cmpi slt, %arg2, %c0_i32_4 : i32
    %7 = arith.extui %6 : i1 to i32
    %c0_i32_5 = arith.constant 0 : i32
    %8 = arith.cmpi ne, %7, %c0_i32_5 : i32
    scf.if %8 {
      %c0_8 = arith.constant 0 : index
      %c0_9 = arith.constant 0 : index
      %12 = vector.load %arg7[%c0_8, %c0_9] : memref<8x128xf32, #tpu.memory_space<vmem>>, vector<8x128xf32>
      %13 = arith.addf %12, %5 : vector<8x128xf32>
      %c0_10 = arith.constant 0 : index
      %c0_11 = arith.constant 0 : index
      %14 = vector.load %arg7[%c0_10, %c0_11] : memref<8x128xf32, #tpu.memory_space<vmem>>, vector<8x128xf32>
      tpu.vector_store %arg7[%c0_10, %c0_11], %13 {strides = array<i32>} : memref<8x128xf32, #tpu.memory_space<vmem>>, vector<8x128xf32>,
    } else {
    }
    %c0_i32_6 = arith.constant 0 : i32
    %9 = arith.cmpi eq, %arg2, %c0_i32_6 : i32
    %10 = arith.extui %9 : i1 to i32
    %c0_i32_7 = arith.constant 0 : i32
    %11 = arith.cmpi ne, %10, %c0_i32_7 : i32
    scf.if %11 {
      %c0_8 = arith.constant 0 : index
      %c0_9 = arith.constant 0 : index
      %12 = vector.load %arg7[%c0_8, %c0_9] : memref<8x128xf32, #tpu.memory_space<vmem>>, vector<8x128xf32>
      %13 = arith.addf %12, %5 : vector<8x128xf32>
      %c0_10 = arith.constant 0 : index
      %c0_11 = arith.constant 0 : index
      %14 = vector.load %arg5[%c0_10, %c0_11] : memref<1x128xf32, #tpu.memory_space<vmem>>, vector<1x128xf32>
      %15 = vector.broadcast %14 : vector<1x128xf32> to vector<8x128xf32>
      %16 = arith.addf %13, %15 : vector<8x128xf32>
      %c0_12 = arith.constant 0 : index
      %c0_13 = arith.constant 0 : index
      %17 = vector.load %arg6[%c0_12, %c0_13] : memref<8x128xf32, #tpu.memory_space<vmem>>, vector<8x128xf32>
      tpu.vector_store %arg6[%c0_12, %c0_13], %16 {strides = array<i32>} : memref<8x128xf32, #tpu.memory_space<vmem>>, vector<8x128xf32>,
    } else {
    }
    return
  }
  func.func @transform_0(%arg0: i32, %arg1: i32, %arg2: i32) -> (i32, i32) {
    %c0_i32 = arith.constant 0 : i32
    return %arg0, %arg2 : i32, i32
  }
  func.func @transform_1(%arg0: i32, %arg1: i32, %arg2: i32) -> (i32, i32) {
    %c0_i32 = arith.constant 0 : i32
    return %arg1, %arg2 : i32, i32
  }
  func.func @transform_2(%arg0: i32, %arg1: i32, %arg2: i32) -> (i32, i32) {
    %c0_i32 = arith.constant 0 : i32
    %c0_i32_0 = arith.constant 0 : i32
    return %c0_i32, %arg1 : i32, i32
  }
  func.func @transform_3(%arg0: i32, %arg1: i32, %arg2: i32) -> (i32, i32) {
    %c0_i32 = arith.constant 0 : i32
    return %arg0, %arg1 : i32, i32
  }
}

</mosaic_0001>

<llo_original>
// kernel: tpu_custom_call.1
$region0: #{tpu_custom_call.1}
  #allocation0 [shape = 'u32[]', space=smem, size = 0x4, offset = 0x4, fixed_abs, tag = 'smem constant byte address 0x4 - core index']
  #allocation1 [shape = 'u32[72,128]{1,0:T(1,128)}', space=vmem, size = 0x9000, scoped, tag = 'internal scratch']
  #allocation2 [shape = 'f32[8,128]{1,0:T(8,128)}', space=vmem, size = 0x1000, scoped, tag = 'scratch operand']
  %s0 = inlined_call_operand.hbm [shape: f32[16,128], index: 0, kind: input, shape index: {}]
  %s1 = inlined_call_operand.hbm [shape: f32[128,128], index: 1, kind: input, shape index: {}]
  %s2 = inlined_call_operand.vmem [shape: f32[1,128], index: 2, kind: input, shape index: {}]
  %s3 = inlined_call_operand.hbm [shape: f32[16,128], index: 3, kind: output, shape index: {}]
  %s4 = sld [smem:[#allocation0]]
  $region65: #{tpu_custom_call.1} parent=0
    _
  %s6 = ssub.s32 1, %s4
  %s7 = scalar_select 0, %s6, %s4
  $region1: #{tpu_custom_call.1} parent=0
    #allocation3 [shape = 'u8[8192]{0}', space=vmem, size = 0x2000, scoped, tag = 'input window, operand 0']
    #allocation4 [shape = 's32[2]{0}', space=sflag, size = 0x8, scoped, tag = 'scoped memory for tpu_custom_call.1']
    #allocation5 [shape = 's32[2]{0}', space=sflag, size = 0x8, scoped, tag = 'scoped memory for tpu_custom_call.1']
    #allocation6 [shape = 'u8[65536]{0}', space=vmem, size = 0x10000, scoped, tag = 'input window, operand 1, single buffered']
    #allocation7 [shape = 's32[1]{0}', space=sflag, size = 0x4, scoped, tag = 'scoped memory for tpu_custom_call.1']
    #allocation8 [shape = 'u8[8192]{0}', space=vmem, size = 0x2000, scoped, tag = 'output window, operand 0']
    %8 = vsyncpa [#allocation4], 0
    %s9 = scalar_lea.sflag [#allocation4], 1
    %10 = vsyncpa %s9, 0
    %11 = vsyncpa [#allocation7], 0
    %12 = vsyncpa [#allocation5], 0
    %s13 = scalar_lea.sflag [#allocation5], 1
    %14 = vsyncpa %s13, 0
    loop: start=0, step=1, limit=4
    $region2: #{tpu_custom_call.1} parent=1 // loop_pre_header
      _
    $region3: #{tpu_custom_call.1} parent=1 // loop_header
      %s16 = sphi 0, %s20
      %p17 = scmp.ge.s32.totalorder %s16, 4
      %s23 = sphi 0, %s42
      %s24 = sphi 0, %s38
      %s25 = sphi 0, %s34
      %s26 = sphi 0, %s23
      %s27 = sphi 0, %s24
      %s28 = sphi 0, %s25
      %s29 = sphi 0, %s26
      %s30 = sphi 0, %s27
      %s31 = sphi 0, %s28
      %s47 = sphi 0, %s49
      %s50 = sphi 0, %s47
      %s51 = sphi 0, %s50
      %s67 = sphi 0, %s51
      %s75 = sphi 0, %s77
      %s78 = sphi 0, %s75
      %s79 = sphi 0, %s78
      %s95 = sphi 0, %s79
      %s101 = sphi 0, %s103
      %s104 = sphi 0, %s101
      %s105 = sphi 0, %s104
      %s121 = sphi 0, %s105
      %s129 = sphi 0, %s131
      %s132 = sphi 0, %s129
      %s133 = sphi 0, %s132
      %s149 = sphi 0, %s133
    $region4: #{tpu_custom_call.1} parent=1 // loop_header_branch
      %19 = sbr.rel (%p17) target = $region8
    $region5: #{tpu_custom_call.1} parent=1 // loop_body
      %s21 = ssub.s32 %s16, 1
      %s22 = ssub.s32 %s16, 2
      %s32 = sadd.s32 1, %s25
      %p33 = scmp.ge.s32.totalorder %s32, 1
      %s34 = scalar_select %p33, 0, %s32
      %s35 = sadd.s32 1, %s24
      %s36 = scalar_select %p33, %s35, %s24
      %p37 = scmp.ge.s32.totalorder %s36, 1
      %s38 = scalar_select %p37, 0, %s36
      %s39 = sadd.s32 1, %s23
      %s40 = scalar_select %p37, %s39, %s23
      %p41 = scmp.ge.s32.totalorder %s40, 2
      %s42 = scalar_select %p41, 0, %s40
      %s43 = ssub.s32 %s23, %s42
      %s44 = ssub.s32 %s25, %s34
      %s45 = sor.u32 %s43, %s44
      %p46 = scmp.eq.s32.totalorder %s45, 0
      %s48 = sadd.s32 %s47, 1
      %s49 = scalar_select %p46, %s47, %s48
      %p52 = pneg %p46
      %p53 = scmp.eq.s32.totalorder %s16, 1
      %p54 = por %p52, %p53
      %p55 = scmp.ne.s32.totalorder %s47, %s50
      %p56 = scmp.eq.s32.totalorder %s16, 0
      %p57 = por %p55, %p56
      %p58 = scmp.ne.s32.totalorder %s47, %s50
      %p59 = scmp.eq.s32.totalorder %s21, 1
      %p60 = por %p58, %p59
      %p61 = scmp.ne.s32.totalorder %s50, %s51
      %p62 = scmp.eq.s32.totalorder %s21, 0
      %p63 = por %p61, %p62
      %p64 = scmp.ne.s32.totalorder %s50, %s51
      %p65 = scmp.eq.s32.totalorder %s22, 1
      %p66 = por %p64, %p65
      %p68 = scmp.ne.s32.totalorder %s51, %s67
      %p69 = scmp.eq.s32.totalorder %s22, 0
      %p70 = por %p68, %p69
      %s71 = ssub.s32 %s24, %s38
      %s72 = ssub.s32 %s25, %s34
      %s73 = sor.u32 %s71, %s72
      %p74 = scmp.eq.s32.totalorder %s73, 0
      %s76 = sadd.s32 %s75, 1
      %s77 = scalar_select %p74, %s75, %s76
      %p80 = pneg %p74
      %p81 = scmp.eq.s32.totalorder %s16, 1
      %p82 = por %p80, %p81
      %p83 = scmp.ne.s32.totalorder %s75, %s78
      %p84 = scmp.eq.s32.totalorder %s16, 0
      %p85 = por %p83, %p84
      %p86 = scmp.ne.s32.totalorder %s75, %s78
      %p87 = scmp.eq.s32.totalorder %s21, 1
      %p88 = por %p86, %p87
      %p89 = scmp.ne.s32.totalorder %s78, %s79
      %p90 = scmp.eq.s32.totalorder %s21, 0
      %p91 = por %p89, %p90
      %p92 = scmp.ne.s32.totalorder %s78, %s79
      %p93 = scmp.eq.s32.totalorder %s22, 1
      %p94 = por %p92, %p93
      %p96 = scmp.ne.s32.totalorder %s79, %s95
      %p97 = scmp.eq.s32.totalorder %s22, 0
      %p98 = por %p96, %p97
      %s99 = ssub.s32 %s24, %s38
      %p100 = scmp.eq.s32.totalorder %s99, 0
      %s102 = sadd.s32 %s101, 1
      %s103 = scalar_select %p100, %s101, %s102
      %p106 = pneg %p100
      %p107 = scmp.eq.s32.totalorder %s16, 1
      %p108 = por %p106, %p107
      %p109 = scmp.ne.s32.totalorder %s101, %s104
      %p110 = scmp.eq.s32.totalorder %s16, 0
      %p111 = por %p109, %p110
      %p112 = scmp.ne.s32.totalorder %s101, %s104
      %p113 = scmp.eq.s32.totalorder %s21, 1
      %p114 = por %p112, %p113
      %p115 = scmp.ne.s32.totalorder %s104, %s105
      %p116 = scmp.eq.s32.totalorder %s21, 0
      %p117 = por %p115, %p116
      %p118 = scmp.ne.s32.totalorder %s104, %s105
      %p119 = scmp.eq.s32.totalorder %s22, 1
      %p120 = por %p118, %p119
      %p122 = scmp.ne.s32.totalorder %s105, %s121
      %p123 = scmp.eq.s32.totalorder %s22, 0
      %p124 = por %p122, %p123
      %s125 = ssub.s32 %s23, %s42
      %s126 = ssub.s32 %s24, %s38
      %s127 = sor.u32 %s125, %s126
      %p128 = scmp.eq.s32.totalorder %s127, 0
      %s130 = sadd.s32 %s129, 1
      %s131 = scalar_select %p128, %s129, %s130
      %p134 = pneg %p128
      %p135 = scmp.eq.s32.totalorder %s16, 1
      %p136 = por %p134, %p135
      %p137 = scmp.ne.s32.totalorder %s129, %s132
      %p138 = scmp.eq.s32.totalorder %s16, 0
      %p139 = por %p137, %p138
      %p140 = scmp.ne.s32.totalorder %s129, %s132
      %p141 = scmp.eq.s32.totalorder %s21, 1
      %p142 = por %p140, %p141
      %p143 = scmp.ne.s32.totalorder %s132, %s133
      %p144 = scmp.eq.s32.totalorder %s21, 0
      %p145 = por %p143, %p144
      %p146 = scmp.ne.s32.totalorder %s132, %s133
      %p147 = scmp.eq.s32.totalorder %s22, 1
      %p148 = por %p146, %p147
      %p150 = scmp.ne.s32.totalorder %s133, %s149
      %p151 = scmp.eq.s32.totalorder %s22, 0
      %p152 = por %p150, %p151
      %p153 = scmp.le.s32.totalorder 1, %s16
      %p154 = scmp.lt.s32.totalorder %s16, 3
      %p155 = pnand %p153, %p154
      %p156 = pneg %p155
      // Predicated region
      $region9: #{tpu_custom_call.1} parent=5 // pred_check
        _
      $region10: #{tpu_custom_call.1} parent=5 // pred_check_branch
        %158 = sbr.rel (%p155) target = $region12
      $region11: #{tpu_custom_call.1} parent=5 // pred_region
        %s159 = ssub.s32 %s16, 1
        // Predicated region
        $region13: #{tpu_custom_call.1} parent=11 // pred_check
          %p160 = pneg %p91
        $region14: #{tpu_custom_call.1} parent=11 // pred_check_branch
          %162 = sbr.rel (%p160) target = $region16
        $region15: #{tpu_custom_call.1} parent=11 // pred_region
          %s163 = smul.u32 16, %s27
          %165 = vsyncadd [#allocation7], 0
          %s166 = sadd.s32 %s28, %s163
          %s167 = smul.addr %s166, 8
          %s168 = scalar_lea.hbm %s1, %s167
          %s169 = sshll.u32 %s168, 4
          %s170 = int_to_ptr.hbm [resolvable:$true] %s169
          %s171 = sshll.u32 [#allocation6], 4
          %s172 = int_to_ptr.vmem [resolvable:$true] %s171
          %177 = dma.hbm_to_vmem [thread:$0]  %s170, 2048, %s172, [#allocation7], 128, 128, 8
        $region16: #{tpu_custom_call.1} parent=11 // pred_fallthru
          _
        // Predicated region
        $region17: #{tpu_custom_call.1} parent=11 // pred_check
          %p178 = pneg %p117
        $region18: #{tpu_custom_call.1} parent=11 // pred_check_branch
          %180 = sbr.rel (%p178) target = $region20
        $region19: #{tpu_custom_call.1} parent=11 // pred_region
          %p181 = scmp.lt.s32.totalorder %s27, 0
          %s182 = scalar_select %p181, %s27, 0
          %s183 = scalar_lea.vmem %s2, %s182
        $region20: #{tpu_custom_call.1} parent=11 // pred_fallthru
          _
      $region12: #{tpu_custom_call.1} parent=5 // pred_fallthru
        _
      %p184 = scmp.lt.s32.totalorder %s16, 2
      // Predicated region
      $region21: #{tpu_custom_call.1} parent=5 // pred_check
        %p185 = pneg %p184
      $region22: #{tpu_custom_call.1} parent=5 // pred_check_branch
        %187 = sbr.rel (%p185) target = $region24
      $region23: #{tpu_custom_call.1} parent=5 // pred_region
        // Predicated region
        $region25: #{tpu_custom_call.1} parent=23 // pred_check
          %p188 = pneg %p57
        $region26: #{tpu_custom_call.1} parent=23 // pred_check_branch
          %190 = sbr.rel (%p188) target = $region28
        $region27: #{tpu_custom_call.1} parent=23 // pred_region
          %s191 = sand.u32 %s47, 1
          %s192 = scalar_lea.sflag [#allocation4], %s191
          %s193 = sand.u32 %s47, 1
          %s194 = smul.addr %s193, 8
          %s195 = scalar_lea.vmem [#allocation3], %s194
          %197 = vsyncadd %s192, 0
          %s198 = sadd.s32 %s25, %s23
          %s199 = smul.addr %s198, 8
          %s200 = scalar_lea.hbm %s0, %s199
          %s202 = sshll.u32 %s200, 4
          %s203 = int_to_ptr.hbm [resolvable:$true] %s202
          %s204 = sshll.u32 %s195, 4
          %s205 = int_to_ptr.vmem [resolvable:$true] %s204
          %207 = dma.hbm_to_vmem [thread:$0]  %s203, 128, %s205, %s192
        $region28: #{tpu_custom_call.1} parent=23 // pred_fallthru
          _
      $region24: #{tpu_custom_call.1} parent=5 // pred_fallthru
        _
      %p208 = scmp.le.s32.totalorder 1, %s16
      %p209 = scmp.lt.s32.totalorder %s16, 3
      %p210 = pnand %p208, %p209
      %p211 = pneg %p210
      // Predicated region
      $region29: #{tpu_custom_call.1} parent=5 // pred_check
        _
      $region30: #{tpu_custom_call.1} parent=5 // pred_check_branch
        %213 = sbr.rel (%p210) target = $region32
      $region31: #{tpu_custom_call.1} parent=5 // pred_region
        %s214 = ssub.s32 %s16, 1
        %s215 = sand.u32 %s50, 1
        %s216 = scalar_lea.sflag [#allocation4], %s215
        %s217 = sand.u32 %s50, 1
        %s218 = smul.addr %s217, 8
        %s219 = scalar_lea.vmem [#allocation3], %s218
        // Predicated region
        $region33: #{tpu_custom_call.1} parent=31 // pred_check
          %p220 = pneg %p63
        $region34: #{tpu_custom_call.1} parent=31 // pred_check_branch
          %222 = sbr.rel (%p220) target = $region36
        $region35: #{tpu_custom_call.1} parent=31 // pred_region
          %224 = dma.done %s216, 128
        $region36: #{tpu_custom_call.1} parent=31 // pred_fallthru
          _
        // Predicated region
        $region37: #{tpu_custom_call.1} parent=31 // pred_check
          %p225 = pneg %p91
        $region38: #{tpu_custom_call.1} parent=31 // pred_check_branch
          %227 = sbr.rel (%p225) target = $region40
        $region39: #{tpu_custom_call.1} parent=31 // pred_region
          %229 = dma.done [#allocation7], 2048
        $region40: #{tpu_custom_call.1} parent=31 // pred_fallthru
          _
        %s230 = sand.u32 %s50, 1
        %s231 = scalar_lea.sflag [#allocation4], %s230
        %s232 = sand.u32 %s50, 1
        %s233 = smul.addr %s232, 8
        %s234 = scalar_lea.vmem [#allocation3], %s233
        %p235 = pneg %p63
        %p236 = pneg %p60
        %p237 = pneg %p91
        %p238 = pneg %p88
        %p239 = scmp.lt.s32.totalorder %s27, 0
        %s240 = scalar_select %p239, %s27, 0
        %s241 = scalar_lea.vmem %s2, %s240
        %p242 = pneg %p117
        %p243 = pneg %p114
        %p244 = pneg %p145
        %p245 = pneg %p142
        %s246 = sand.u32 %s132, 1
        %s247 = scalar_lea.sflag [#allocation5], %s246
        %s248 = sand.u32 %s132, 1
        %s249 = smul.addr %s248, 8
        %s250 = scalar_lea.vmem [#allocation8], %s249
        %s251 = smul.u32 16, %s27
        %p252 = scmp.lt.s32.totalorder %s27, 0
        %s253 = scalar_select %p252, %s27, 0
        %s254 = scalar_lea.vmem %s2, %s253
        %p255 = scmp.eq.s32.totalorder %s28, 0
        // Predicated region
        $region41: #{tpu_custom_call.1} parent=31 // pred_check
          %p256 = pneg %p255
        $region42: #{tpu_custom_call.1} parent=31 // pred_check_branch
          %258 = sbr.rel (%p256) target = $region44
        $region43: #{tpu_custom_call.1} parent=31 // pred_region
          %259 = vst [vmem:[#allocation2] sm:$0xff] 0.0
        $region44: #{tpu_custom_call.1} parent=31 // pred_fallthru
          _
        %v260 = vld [vmem:[%s219] sm:$0xff]
        %v261 = vld [vmem:[#allocation6] sm:$0xff]
        %v262 = vld [vmem:[#allocation6 + $0x8] sm:$0xff]
        %v263 = vld [vmem:[#allocation6 + $0x10] sm:$0xff]
        %v264 = vld [vmem:[#allocation6 + $0x18] sm:$0xff]
        %v265 = vld [vmem:[#allocation6 + $0x20] sm:$0xff]
        %v266 = vld [vmem:[#allocation6 + $0x28] sm:$0xff]
        %v267 = vld [vmem:[#allocation6 + $0x30] sm:$0xff]
        %v268 = vld [vmem:[#allocation6 + $0x38] sm:$0xff]
        %v269 = vld [vmem:[#allocation6 + $0x40] sm:$0xff]
        %v270 = vld [vmem:[#allocation6 + $0x48] sm:$0xff]
        %v271 = vld [vmem:[#allocation6 + $0x50] sm:$0xff]
        %v272 = vld [vmem:[#allocation6 + $0x58] sm:$0xff]
        %v273 = vld [vmem:[#allocation6 + $0x60] sm:$0xff]
        %v274 = vld [vmem:[#allocation6 + $0x68] sm:$0xff]
        %v275 = vld [vmem:[#allocation6 + $0x70] sm:$0xff]
        %v276 = vld [vmem:[#allocation6 + $0x78] sm:$0xff]
        %277 = vmatpush.xpose.msra.mxu0 %v276
        %278 = vmatpush.xpose.msra.mxu0 %v275
        %279 = vmatpush.xpose.msra.mxu0 %v274
        %280 = vmatpush.xpose.msra.mxu0 %v273
        %281 = vmatpush.xpose.msra.mxu0 %v272
        %282 = vmatpush.xpose.msra.mxu0 %v271
        %283 = vmatpush.xpose.msra.mxu0 %v270
        %284 = vmatpush.xpose.msra.mxu0 %v269
        %285 = vmatpush.xpose.msra.mxu0 %v268
        %286 = vmatpush.xpose.msra.mxu0 %v267
        %287 = vmatpush.xpose.msra.mxu0 %v266
        %288 = vmatpush.xpose.msra.mxu0 %v265
        %289 = vmatpush.xpose.msra.mxu0 %v264
        %290 = vmatpush.xpose.msra.mxu0 %v263
        %291 = vmatpush.xpose.msra.mxu0 %v262
        %292 = vmatpush.xpose.msra.mxu0 %v261
        %293 = vmatmul.f32.gmra.mxu0 %v260
        %v294 = vpop.f32.mrf.mxu0
        %v295 = vadd.f32 0.0, %v294
        %296 = vdwg.mxu0
        %p297 = scmp.lt.s32.totalorder %s28, 0
        // Predicated region
        $region45: #{tpu_custom_call.1} parent=31 // pred_check
          %p298 = pneg %p297
        $region46: #{tpu_custom_call.1} parent=31 // pred_check_branch
          %300 = sbr.rel (%p298) target = $region48
        $region47: #{tpu_custom_call.1} parent=31 // pred_region
          %v301 = vld [vmem:[#allocation2] sm:$0xff]
          %v302 = vadd.f32 %v301, %v295
          %303 = vst [vmem:[#allocation2] sm:$0xff] %v302
        $region48: #{tpu_custom_call.1} parent=31 // pred_fallthru
          _
        // Predicated region
        $region49: #{tpu_custom_call.1} parent=31 // pred_check
          %p304 = pneg %p255
        $region50: #{tpu_custom_call.1} parent=31 // pred_check_branch
          %306 = sbr.rel (%p304) target = $region52
        $region51: #{tpu_custom_call.1} parent=31 // pred_region
          %v307 = vld [vmem:[#allocation2] sm:$0xff]
          %v308 = vadd.f32 %v307, %v295
          %v309 = vld [vmem:[%s254] sm:$0x1]
          %v311 = vperm.slane %v309, 0
          %v313 = vadd.f32 %v308, %v311
          %314 = vst [vmem:[%s250] sm:$0xff] %v313
        $region52: #{tpu_custom_call.1} parent=31 // pred_fallthru
          _
        %s315 = sand.u32 %s132, 1
        %s316 = scalar_lea.sflag [#allocation5], %s315
        %s317 = sand.u32 %s132, 1
        %s318 = smul.addr %s317, 8
        %s319 = scalar_lea.vmem [#allocation8], %s318
        // Predicated region
        $region53: #{tpu_custom_call.1} parent=31 // pred_check
          %p320 = pneg %p142
        $region54: #{tpu_custom_call.1} parent=31 // pred_check_branch
          %322 = sbr.rel (%p320) target = $region56
        $region55: #{tpu_custom_call.1} parent=31 // pred_region
          %324 = vsyncadd %s316, 0
          %s325 = sadd.s32 %s27, %s26
          %s326 = smul.addr %s325, 8
          %s327 = scalar_lea.hbm %s3, %s326
          %s329 = sshll.u32 %s319, 4
          %s330 = int_to_ptr.vmem [resolvable:$true] %s329
          %s331 = sshll.u32 %s327, 4
          %s332 = int_to_ptr.hbm [resolvable:$true] %s331
          %334 = dma.vmem_to_hbm [thread:$0]  %s330, 128, %s332, %s316
        $region56: #{tpu_custom_call.1} parent=31 // pred_fallthru
          _
      $region32: #{tpu_custom_call.1} parent=5 // pred_fallthru
        _
      %p335 = scmp.le.s32.totalorder 2, %s16
      // Predicated region
      $region57: #{tpu_custom_call.1} parent=5 // pred_check
        %p336 = pneg %p335
      $region58: #{tpu_custom_call.1} parent=5 // pred_check_branch
        %338 = sbr.rel (%p336) target = $region60
      $region59: #{tpu_custom_call.1} parent=5 // pred_region
        %s339 = ssub.s32 %s16, 2
        // Predicated region
        $region61: #{tpu_custom_call.1} parent=59 // pred_check
          %p340 = pneg %p148
        $region62: #{tpu_custom_call.1} parent=59 // pred_check_branch
          %342 = sbr.rel (%p340) target = $region64
        $region63: #{tpu_custom_call.1} parent=59 // pred_region
          %s343 = sand.u32 %s133, 1
          %s344 = scalar_lea.sflag [#allocation5], %s343
          %s345 = sand.u32 %s133, 1
          %s346 = smul.addr %s345, 8
          %s347 = scalar_lea.vmem [#allocation8], %s346
          %349 = dma.done %s344, 128
        $region64: #{tpu_custom_call.1} parent=59 // pred_fallthru
          _
      $region60: #{tpu_custom_call.1} parent=5 // pred_fallthru
        _
    $region6: #{tpu_custom_call.1} parent=1 // loop_footer
      %s20 = sadd.s32 1, %s16
    $region7: #{tpu_custom_call.1} parent=1 // loop_footer_branch
      %15 = sbr.rel target = $region3
    $region8: #{tpu_custom_call.1} parent=1 // loop_exit
      _
    %350 = vsyncpa [#allocation4], 1
    %s351 = scalar_lea.sflag [#allocation4], 1
    %352 = vsyncpa %s351, 1
    %353 = vsyncpa [#allocation7], 1
    %354 = vsyncpa [#allocation5], 1
    %s355 = scalar_lea.sflag [#allocation5], 1
    %356 = vsyncpa %s355, 1

</llo_original>
